<compile_context>
chip_gen: v7x
topology: tpu7x:2x2x1
jax: 0.10.0
libtpu: 0.0.40
codegen_flags: <defaults>
</compile_context>

<pallas_src>
import functools

import jax
import jax.numpy as jnp
from jax import lax
from jax.experimental import pallas as pl
from jax.experimental.pallas import tpu as pltpu


def _dice_topk_kernel(logits_ref, target_ref, stats_ref, ce_ref,
                      acc_int, acc_pred, acc_gt):
    """One spatial tile of one (batch, spatial-chunk).

    logits_ref: (1, C, TN)  native dtype     target_ref: (1, 1, TN) int32
    stats_ref:  (1, 1, C, 128) f32           (lanes 0..2 = intersect, sum_pred, sum_gt)
    ce_ref:     (1, 1, TN) f32               per-pixel CE loss
    acc_*:      (C, 1) f32 VMEM scratch accumulators
    """
    t = pl.program_id(2)

    @pl.when(t == 0)
    def _():
        acc_int[...] = jnp.zeros_like(acc_int)
        acc_pred[...] = jnp.zeros_like(acc_pred)
        acc_gt[...] = jnp.zeros_like(acc_gt)

    logits = logits_ref[0].astype(jnp.float32)           # (C, TN)
    tgt = target_ref[0]                                   # (1, TN) int32
    C, TN = logits.shape

    # ---- softmax over the channel (sublane) axis + logsumexp for CE ----
    m = jnp.max(logits, axis=0, keepdims=True)            # (1, TN)
    e = jnp.exp(logits - m)                                # (C, TN)  (EUP)
    s = jnp.sum(e, axis=0, keepdims=True)                  # (1, TN)
    inv_s = pl.reciprocal(s, approx=False)                 # (1, TN)
    probs = e * inv_s                                       # (C, TN)
    lse = m + jnp.log(s)                                    # (1, TN)

    # ---- one boolean class mask per tile (no float one-hots) ----
    class_ids = lax.broadcasted_iota(jnp.int32, (C, TN), 0)
    mask_t = tgt == class_ids                                # (C, TN) bool

    # ---- per-class partial sums, accumulated into VMEM scratch ----
    acc_int[...] += jnp.sum(jnp.where(mask_t, probs, 0.0), axis=1, keepdims=True)
    acc_pred[...] += jnp.sum(probs, axis=1, keepdims=True)
    acc_gt[...] += jnp.sum(jnp.where(mask_t, 1.0, 0.0), axis=1, keepdims=True)

    # ---- per-pixel CE for the TopK selection (lane-dense output write) ----
    logit_at_t = jnp.sum(jnp.where(mask_t, logits, 0.0), axis=0, keepdims=True)  # (1, TN)
    ce_ref[...] = (lse - logit_at_t)[None]                   # (1, 1, TN)

    # ---- assemble stats output once, at the last spatial tile of this chunk ----
    @pl.when(t == pl.num_programs(2) - 1)
    def _():
        col = lax.broadcasted_iota(jnp.int32, (C, 128), 1)
        zeros = jnp.zeros((C, 128), jnp.float32)
        out = (jnp.where(col == 0, acc_int[...], zeros)
               + jnp.where(col == 1, acc_pred[...], zeros)
               + jnp.where(col == 2, acc_gt[...], zeros))
        stats_ref[...] = out[None, None]


@functools.partial(
    jax.jit,
    static_argnames=("weight_ce", "weight_dice", "k", "smooth",
                     "batch_dice", "do_bg", "tile_n", "spatial_splits"),
)
def dc_and_topk_loss(net_output, target, *,
                     weight_ce=1.0, weight_dice=1.0,
                     k=10.0, smooth=1e-5,
                     batch_dice=False, do_bg=False,
                     tile_n=1024, spatial_splits=2):
    B, C, H, W = net_output.shape
    N = H * W

    # spatial split for megacore parallelism (harmless loop-split on 1-TC chips)
    P = spatial_splits if (spatial_splits > 0 and N % spatial_splits == 0) else 1
    Np = N // P

    # largest multiple of 128 that divides the chunk and is <= requested tile_n
    tn = 0
    for cand in range(128, min(tile_n, Np) + 1, 128):
        if Np % cand == 0:
            tn = cand
    assert tn > 0, "flattened spatial chunk must be a multiple of 128"
    tiles_per_chunk = Np // tn

    # no wrapper-side up-casts: pass native dtypes, cast in-register inside the kernel
    logits = net_output.reshape(B, C, N)
    tgt = target.reshape(B, 1, N)
    if tgt.dtype != jnp.int32:
        tgt = tgt.astype(jnp.int32)

    stats, ce_pix = pl.pallas_call(
        _dice_topk_kernel,
        out_shape=(jax.ShapeDtypeStruct((B, P, C, 128), jnp.float32),
                   jax.ShapeDtypeStruct((B, 1, N), jnp.float32)),
        grid_spec=pltpu.PrefetchScalarGridSpec(
            num_scalar_prefetch=0,
            grid=(B, P, tiles_per_chunk),
            in_specs=[
                pl.BlockSpec((1, C, tn),
                             lambda b, p, t: (b, 0, p * tiles_per_chunk + t)),
                pl.BlockSpec((1, 1, tn),
                             lambda b, p, t: (b, 0, p * tiles_per_chunk + t)),
            ],
            out_specs=[
                pl.BlockSpec((1, 1, C, 128), lambda b, p, t: (b, p, 0, 0)),
                pl.BlockSpec((1, 1, tn),
                             lambda b, p, t: (b, 0, p * tiles_per_chunk + t)),
            ],
            scratch_shapes=[pltpu.VMEM((C, 1), jnp.float32)] * 3,
        ),
        compiler_params=pltpu.CompilerParams(
            dimension_semantics=("parallel", "parallel", "arbitrary")),
    )(logits, tgt)

    # ---- SoftDice (apply_nonlin=softmax) from accumulated statistics ----
    intersect = jnp.sum(stats[..., 0], axis=1)    # (B, C): sum over spatial chunks
    sum_pred = jnp.sum(stats[..., 1], axis=1)
    sum_gt = jnp.sum(stats[..., 2], axis=1)

    if not do_bg:  # drop background class 0
        intersect, sum_pred, sum_gt = intersect[:, 1:], sum_pred[:, 1:], sum_gt[:, 1:]
    if batch_dice:
        intersect = intersect.sum(0)
        sum_pred = sum_pred.sum(0)
        sum_gt = sum_gt.sum(0)

    dc = (2.0 * intersect + smooth) / jnp.clip(sum_gt + sum_pred + smooth, 1e-8)
    dc_loss = -jnp.mean(dc)

    # ---- TopKLoss: mean of the top k% per-pixel cross-entropy values ----
    num_voxels = B * N
    n_keep = max(1, int(num_voxels * k / 100))   # matches torch int() truncation
    top_vals, _ = lax.top_k(ce_pix.reshape(-1), n_keep)
    ce_loss = jnp.mean(top_vals)

    # TODO(synk): ignore_label masking branch and DDP all-gather are not implemented
    # (ignore_label=None, ddp=False exercised here).
    return weight_ce * ce_loss + weight_dice * dc_loss


def _reference_loss(net_output, target, *, weight_ce=1.0, weight_dice=1.0,
                    k=10.0, smooth=1e-5):
    """Pure-JAX re-implementation of DC_and_topk_loss.forward (ignore_label=None)."""
    B, C, H, W = net_output.shape
    x = net_output.astype(jnp.float32)
    probs = jax.nn.softmax(x, axis=1)
    cls = jnp.arange(C).reshape(1, C, 1, 1)
    onehot_t = (target.astype(jnp.int32) == cls).astype(jnp.float32)
    axes = (2, 3)

    intersect = jnp.sum(probs * onehot_t, axis=axes)[:, 1:]
    sum_pred = jnp.sum(probs, axis=axes)[:, 1:]
    sum_gt = jnp.sum(onehot_t, axis=axes)[:, 1:]
    dc = (2 * intersect + smooth) / jnp.clip(sum_gt + sum_pred + smooth, 1e-8)
    dc_loss = -jnp.mean(dc)

    logp = jax.nn.log_softmax(x, axis=1)
    t0 = target[:, 0].astype(jnp.int32)                       # (B, H, W)
    ce_pix = -jnp.take_along_axis(logp, t0[:, None], axis=1)[:, 0]
    num_voxels = B * H * W
    n_keep = max(1, int(num_voxels * k / 100))
    top_vals, _ = lax.top_k(ce_pix.reshape(-1), n_keep)
    ce_loss = jnp.mean(top_vals)

    return weight_ce * ce_loss + weight_dice * dc_loss


if __name__ == "__main__":
    B, C, H, W = 2, 4, 16, 16
    key = jax.random.PRNGKey(0)
    k1, k2 = jax.random.split(key, 2)

    net_output = jax.random.normal(k1, (B, C, H, W), dtype=jnp.float32)
    target = jax.random.randint(k2, (B, 1, H, W), 0, C, dtype=jnp.int32)

    ref = _reference_loss(net_output, target)

    # default config (2-way spatial split, auto tile size)
    loss = dc_and_topk_loss(net_output, target)
    loss = jax.block_until_ready(loss)
    assert jnp.isfinite(loss), "kernel produced non-finite loss"
    assert jnp.allclose(loss, ref, rtol=1e-4, atol=1e-4), (loss, ref)

    # alternative tiling: exercises accumulation across multiple spatial tiles
    loss2 = dc_and_topk_loss(net_output, target, tile_n=128, spatial_splits=1)
    loss2 = jax.block_until_ready(loss2)
    assert jnp.allclose(loss2, ref, rtol=1e-4, atol=1e-4), (loss2, ref)

    print("KERNEL_OK")
</pallas_src>

<mosaic_0001>
module attributes {stable_mosaic.version = 11 : i64} {
  func.func @_dice_topk_kernel(%arg0: i32, %arg1: i32, %arg2: i32, %arg3: memref<1x4x128xf32, #tpu.memory_space<vmem>>, %arg4: memref<1x1x128xi32, #tpu.memory_space<vmem>>, %arg5: memref<1x1x4x128xf32, #tpu.memory_space<vmem>>, %arg6: memref<1x1x128xf32, #tpu.memory_space<vmem>>, %arg7: memref<4x1xf32, #tpu.memory_space<vmem>>, %arg8: memref<4x1xf32, #tpu.memory_space<vmem>>, %arg9: memref<4x1xf32, #tpu.memory_space<vmem>>) attributes {dimension_semantics = [#tpu.dimension_semantics<parallel>, #tpu.dimension_semantics<parallel>, #tpu.dimension_semantics<arbitrary>], iteration_bounds = array<i64: 2, 2, 1>, scalar_prefetch = 0 : i64, scratch_operands = 3 : i64, tpu.core_type = #tpu.core_type<tc>, window_params = [{transform_indices = @transform_0, window_bounds = array<i64: 1, 4, 128>}, {transform_indices = @transform_1, window_bounds = array<i64: 1, 1, 128>}, {transform_indices = @transform_2, window_bounds = array<i64: 1, 1, 4, 128>}, {transform_indices = @transform_3, window_bounds = array<i64: 1, 1, 128>}]} {
    %c0_i32 = arith.constant 0 : i32
    %0 = arith.cmpi eq, %arg2, %c0_i32 : i32
    %1 = arith.extui %0 : i1 to i32
    %c0_i32_0 = arith.constant 0 : i32
    %2 = arith.cmpi ne, %1, %c0_i32_0 : i32
    scf.if %2 {
      %cst_32 = arith.constant 0.000000e+00 : f32
      %52 = vector.broadcast %cst_32 : f32 to vector<4x1xf32>
      %c0_33 = arith.constant 0 : index
      %c0_34 = arith.constant 0 : index
      %53 = vector.load %arg7[%c0_33, %c0_34] : memref<4x1xf32, #tpu.memory_space<vmem>>, vector<4x1xf32>
      tpu.vector_store %arg7[%c0_33, %c0_34], %52 {strides = array<i32>} : memref<4x1xf32, #tpu.memory_space<vmem>>, vector<4x1xf32>,
      %cst_35 = arith.constant 0.000000e+00 : f32
      %54 = vector.broadcast %cst_35 : f32 to vector<4x1xf32>
      %c0_36 = arith.constant 0 : index
      %c0_37 = arith.constant 0 : index
      %55 = vector.load %arg8[%c0_36, %c0_37] : memref<4x1xf32, #tpu.memory_space<vmem>>, vector<4x1xf32>
      tpu.vector_store %arg8[%c0_36, %c0_37], %54 {strides = array<i32>} : memref<4x1xf32, #tpu.memory_space<vmem>>, vector<4x1xf32>,
      %cst_38 = arith.constant 0.000000e+00 : f32
      %56 = vector.broadcast %cst_38 : f32 to vector<4x1xf32>
      %c0_39 = arith.constant 0 : index
      %c0_40 = arith.constant 0 : index
      %57 = vector.load %arg9[%c0_39, %c0_40] : memref<4x1xf32, #tpu.memory_space<vmem>>, vector<4x1xf32>
      tpu.vector_store %arg9[%c0_39, %c0_40], %56 {strides = array<i32>} : memref<4x1xf32, #tpu.memory_space<vmem>>, vector<4x1xf32>,
    } else {
    }
    %c0 = arith.constant 0 : index
    %c0_1 = arith.constant 0 : index
    %c0_2 = arith.constant 0 : index
    %3 = vector.load %arg3[%c0, %c0_1, %c0_2] : memref<1x4x128xf32, #tpu.memory_space<vmem>>, vector<1x4x128xf32>
    %4 = vector.shape_cast %3 : vector<1x4x128xf32> to vector<4x128xf32>
    %c0_3 = arith.constant 0 : index
    %c0_4 = arith.constant 0 : index
    %c0_5 = arith.constant 0 : index
    %5 = vector.load %arg4[%c0_3, %c0_4, %c0_5] : memref<1x1x128xi32, #tpu.memory_space<vmem>>, vector<1x1x128xi32>
    %6 = vector.shape_cast %5 : vector<1x1x128xi32> to vector<1x128xi32>
    %cst = arith.constant dense<0xFF800000> : vector<128xf32>
    %7 = vector.multi_reduction <maximumf>, %4, %cst [0] : vector<4x128xf32> to vector<128xf32>
    %8 = vector.shape_cast %7 : vector<128xf32> to vector<1x128xf32>
    %9 = vector.broadcast %8 : vector<1x128xf32> to vector<4x128xf32>
    %10 = arith.subf %4, %9 : vector<4x128xf32>
    %11 = math.exp %10 : vector<4x128xf32>
    %cst_6 = arith.constant dense<0.000000e+00> : vector<128xf32>
    %12 = vector.multi_reduction <add>, %11, %cst_6 [0] : vector<4x128xf32> to vector<128xf32>
    %13 = vector.shape_cast %12 : vector<128xf32> to vector<1x128xf32>
    %14 = tpu.reciprocal %13 : vector<1x128xf32> -> vector<1x128xf32>
    %15 = vector.broadcast %14 : vector<1x128xf32> to vector<4x128xf32>
    %16 = arith.mulf %11, %15 : vector<4x128xf32>
    %17 = math.log %13 : vector<1x128xf32>
    %18 = arith.addf %8, %17 : vector<1x128xf32>
    %19 = tpu.iota {dimensions = array<i32: 0>} : vector<4x128xi32>
    %20 = vector.broadcast %6 : vector<1x128xi32> to vector<4x128xi32>
    %21 = arith.cmpi eq, %20, %19 : vector<4x128xi32>
    %c0_7 = arith.constant 0 : index
    %c0_8 = arith.constant 0 : index
    %22 = vector.load %arg7[%c0_7, %c0_8] : memref<4x1xf32, #tpu.memory_space<vmem>>, vector<4x1xf32>
    %cst_9 = arith.constant 0.000000e+00 : f32
    %23 = vector.broadcast %cst_9 : f32 to vector<4x128xf32>
    %24 = arith.select %21, %16, %23 : vector<4x128xi1>, vector<4x128xf32>
    %cst_10 = arith.constant dense<0.000000e+00> : vector<4xf32>
    %25 = vector.multi_reduction <add>, %24, %cst_10 [1] : vector<4x128xf32> to vector<4xf32>
    %26 = vector.shape_cast %25 : vector<4xf32> to vector<4x1xf32>
    %27 = arith.addf %22, %26 : vector<4x1xf32>
    %c0_11 = arith.constant 0 : index
    %c0_12 = arith.constant 0 : index
    %28 = vector.load %arg7[%c0_11, %c0_12] : memref<4x1xf32, #tpu.memory_space<vmem>>, vector<4x1xf32>
    tpu.vector_store %arg7[%c0_11, %c0_12], %27 {strides = array<i32>} : memref<4x1xf32, #tpu.memory_space<vmem>>, vector<4x1xf32>,
    %c0_13 = arith.constant 0 : index
    %c0_14 = arith.constant 0 : index
    %29 = vector.load %arg8[%c0_13, %c0_14] : memref<4x1xf32, #tpu.memory_space<vmem>>, vector<4x1xf32>
    %cst_15 = arith.constant dense<0.000000e+00> : vector<4xf32>
    %30 = vector.multi_reduction <add>, %16, %cst_15 [1] : vector<4x128xf32> to vector<4xf32>
    %31 = vector.shape_cast %30 : vector<4xf32> to vector<4x1xf32>
    %32 = arith.addf %29, %31 : vector<4x1xf32>
    %c0_16 = arith.constant 0 : index
    %c0_17 = arith.constant 0 : index
    %33 = vector.load %arg8[%c0_16, %c0_17] : memref<4x1xf32, #tpu.memory_space<vmem>>, vector<4x1xf32>
    tpu.vector_store %arg8[%c0_16, %c0_17], %32 {strides = array<i32>} : memref<4x1xf32, #tpu.memory_space<vmem>>, vector<4x1xf32>,
    %c0_18 = arith.constant 0 : index
    %c0_19 = arith.constant 0 : index
    %34 = vector.load %arg9[%c0_18, %c0_19] : memref<4x1xf32, #tpu.memory_space<vmem>>, vector<4x1xf32>
    %cst_20 = arith.constant 1.000000e+00 : f32
    %cst_21 = arith.constant 0.000000e+00 : f32
    %35 = vector.broadcast %cst_20 : f32 to vector<4x128xf32>
    %36 = vector.broadcast %cst_21 : f32 to vector<4x128xf32>
    %37 = arith.select %21, %35, %36 : vector<4x128xi1>, vector<4x128xf32>
    %cst_22 = arith.constant dense<0.000000e+00> : vector<4xf32>
    %38 = vector.multi_reduction <add>, %37, %cst_22 [1] : vector<4x128xf32> to vector<4xf32>
    %39 = vector.shape_cast %38 : vector<4xf32> to vector<4x1xf32>
    %40 = arith.addf %34, %39 : vector<4x1xf32>
    %c0_23 = arith.constant 0 : index
    %c0_24 = arith.constant 0 : index
    %41 = vector.load %arg9[%c0_23, %c0_24] : memref<4x1xf32, #tpu.memory_space<vmem>>, vector<4x1xf32>
    tpu.vector_store %arg9[%c0_23, %c0_24], %40 {strides = array<i32>} : memref<4x1xf32, #tpu.memory_space<vmem>>, vector<4x1xf32>,
    %cst_25 = arith.constant 0.000000e+00 : f32
    %42 = vector.broadcast %cst_25 : f32 to vector<4x128xf32>
    %43 = arith.select %21, %4, %42 : vector<4x128xi1>, vector<4x128xf32>
    %cst_26 = arith.constant dense<0.000000e+00> : vector<128xf32>
    %44 = vector.multi_reduction <add>, %43, %cst_26 [0] : vector<4x128xf32> to vector<128xf32>
    %45 = vector.shape_cast %44 : vector<128xf32> to vector<1x128xf32>
    %46 = arith.subf %18, %45 : vector<1x128xf32>
    %47 = vector.shape_cast %46 : vector<1x128xf32> to vector<1x1x128xf32>
    %c0_27 = arith.constant 0 : index
    %c0_28 = arith.constant 0 : index
    %c0_29 = arith.constant 0 : index
    %48 = vector.load %arg6[%c0_27, %c0_28, %c0_29] : memref<1x1x128xf32, #tpu.memory_space<vmem>>, vector<1x1x128xf32>
    tpu.vector_store %arg6[%c0_27, %c0_28, %c0_29], %47 {strides = array<i32>} : memref<1x1x128xf32, #tpu.memory_space<vmem>>, vector<1x1x128xf32>,
    %c0_i32_30 = arith.constant 0 : i32
    %49 = arith.cmpi eq, %arg2, %c0_i32_30 : i32
    %50 = arith.extui %49 : i1 to i32
    %c0_i32_31 = arith.constant 0 : i32
    %51 = arith.cmpi ne, %50, %c0_i32_31 : i32
    scf.if %51 {
      %52 = tpu.iota {dimensions = array<i32: 1>} : vector<4x128xi32>
      %cst_32 = arith.constant 0.000000e+00 : f32
      %53 = vector.broadcast %cst_32 : f32 to vector<4x128xf32>
      %c0_i32_33 = arith.constant 0 : i32
      %54 = vector.broadcast %c0_i32_33 : i32 to vector<4x128xi32>
      %55 = arith.cmpi eq, %52, %54 : vector<4x128xi32>
      %c0_34 = arith.constant 0 : index
      %c0_35 = arith.constant 0 : index
      %56 = vector.load %arg7[%c0_34, %c0_35] : memref<4x1xf32, #tpu.memory_space<vmem>>, vector<4x1xf32>
      %57 = vector.shape_cast %56 : vector<4x1xf32> to vector<4x1xf32>
      %58 = vector.broadcast %57 : vector<4x1xf32> to vector<4x128xf32>
      %59 = arith.select %55, %58, %53 : vector<4x128xi1>, vector<4x128xf32>
      %c1_i32 = arith.constant 1 : i32
      %60 = vector.broadcast %c1_i32 : i32 to vector<4x128xi32>
      %61 = arith.cmpi eq, %52, %60 : vector<4x128xi32>
      %c0_36 = arith.constant 0 : index
      %c0_37 = arith.constant 0 : index
      %62 = vector.load %arg8[%c0_36, %c0_37] : memref<4x1xf32, #tpu.memory_space<vmem>>, vector<4x1xf32>
      %63 = vector.shape_cast %62 : vector<4x1xf32> to vector<4x1xf32>
      %64 = vector.broadcast %63 : vector<4x1xf32> to vector<4x128xf32>
      %65 = arith.select %61, %64, %53 : vector<4x128xi1>, vector<4x128xf32>
      %66 = arith.addf %59, %65 : vector<4x128xf32>
      %c2_i32 = arith.constant 2 : i32
      %67 = vector.broadcast %c2_i32 : i32 to vector<4x128xi32>
      %68 = arith.cmpi eq, %52, %67 : vector<4x128xi32>
      %c0_38 = arith.constant 0 : index
      %c0_39 = arith.constant 0 : index
      %69 = vector.load %arg9[%c0_38, %c0_39] : memref<4x1xf32, #tpu.memory_space<vmem>>, vector<4x1xf32>
      %70 = vector.shape_cast %69 : vector<4x1xf32> to vector<4x1xf32>
      %71 = vector.broadcast %70 : vector<4x1xf32> to vector<4x128xf32>
      %72 = arith.select %68, %71, %53 : vector<4x128xi1>, vector<4x128xf32>
      %73 = arith.addf %66, %72 : vector<4x128xf32>
      %74 = vector.shape_cast %73 : vector<4x128xf32> to vector<1x1x4x128xf32>
      %c0_40 = arith.constant 0 : index
      %c0_41 = arith.constant 0 : index
      %c0_42 = arith.constant 0 : index
      %c0_43 = arith.constant 0 : index
      %75 = vector.load %arg5[%c0_40, %c0_41, %c0_42, %c0_43] : memref<1x1x4x128xf32, #tpu.memory_space<vmem>>, vector<1x1x4x128xf32>
      tpu.vector_store %arg5[%c0_40, %c0_41, %c0_42, %c0_43], %74 {strides = array<i32>} : memref<1x1x4x128xf32, #tpu.memory_space<vmem>>, vector<1x1x4x128xf32>,
    } else {
    }
    return
  }
  func.func @transform_0(%arg0: i32, %arg1: i32, %arg2: i32) -> (i32, i32, i32) {
    %c1_i32 = arith.constant 1 : i32
    %0 = arith.muli %arg1, %c1_i32 : i32
    %1 = arith.addi %0, %arg2 : i32
    %c0_i32 = arith.constant 0 : i32
    %c0_i32_0 = arith.constant 0 : i32
    return %arg0, %c0_i32, %1 : i32, i32, i32
  }
  func.func @transform_1(%arg0: i32, %arg1: i32, %arg2: i32) -> (i32, i32, i32) {
    %c1_i32 = arith.constant 1 : i32
    %0 = arith.muli %arg1, %c1_i32 : i32
    %1 = arith.addi %0, %arg2 : i32
    %c0_i32 = arith.constant 0 : i32
    %c0_i32_0 = arith.constant 0 : i32
    return %arg0, %c0_i32, %1 : i32, i32, i32
  }
  func.func @transform_2(%arg0: i32, %arg1: i32, %arg2: i32) -> (i32, i32, i32, i32) {
    %c0_i32 = arith.constant 0 : i32
    %c0_i32_0 = arith.constant 0 : i32
    %c0_i32_1 = arith.constant 0 : i32
    return %arg0, %arg1, %c0_i32, %c0_i32_0 : i32, i32, i32, i32
  }
  func.func @transform_3(%arg0: i32, %arg1: i32, %arg2: i32) -> (i32, i32, i32) {
    %c1_i32 = arith.constant 1 : i32
    %0 = arith.muli %arg1, %c1_i32 : i32
    %1 = arith.addi %0, %arg2 : i32
    %c0_i32 = arith.constant 0 : i32
    %c0_i32_0 = arith.constant 0 : i32
    return %arg0, %c0_i32, %1 : i32, i32, i32
  }
}

</mosaic_0001>

<llo_original>
// kernel: dc_and_topk_loss.1
$region0: #{dc_and_topk_loss.1}
  #allocation0 [shape = 'u32[]', space=smem, size = 0x4, offset = 0x4, fixed_abs, tag = 'smem constant byte address 0x4 - core index']
  #allocation1 [shape = 'u32[144,128]{1,0:T(1,128)}', space=vmem, size = 0x12000, scoped, tag = 'internal scratch']
  #allocation2 [shape = 'f32[4,1]{1,0:T(4,128)}', space=vmem, size = 0x800, scoped, tag = 'scratch operand']
  #allocation3 [shape = 'f32[4,1]{1,0:T(4,128)}', space=vmem, size = 0x800, scoped, tag = 'scratch operand']
  #allocation4 [shape = 'f32[4,1]{1,0:T(4,128)}', space=vmem, size = 0x800, scoped, tag = 'scratch operand']
  %s0 = inlined_call_operand.vmem [shape: f32[2,4,256], index: 0, kind: input, shape index: {}]
  %s1 = inlined_call_operand.vmem [shape: s32[2,1,256], index: 1, kind: input, shape index: {}]
  %s2 = inlined_call_operand.vmem [shape: f32[2,2,4,128], index: 2, kind: output, shape index: {0}]
  %s3 = inlined_call_operand.vmem [shape: f32[2,1,256], index: 3, kind: output, shape index: {1}]
  %4 = xla_tuple %s2, %s3
  %s5 = sld [smem:[#allocation0]]
  $region57: #{dc_and_topk_loss.1} parent=0
    _
  %s7 = ssub.s32 1, %s5
  %s8 = scalar_select 0, %s7, %s5
  loop: start=0, step=1, limit=6
  $region2: #{dc_and_topk_loss.1} parent=0 // loop_pre_header
    _
  $region3: #{dc_and_topk_loss.1} parent=0 // loop_header
    %s10 = sphi 0, %s14
    %p11 = scmp.ge.s32.totalorder %s10, 6
    %s17 = sphi 0, %s36
    %s18 = sphi 0, %s32
    %s19 = sphi 0, %s28
    %s20 = sphi 0, %s17
    %s21 = sphi 0, %s18
    %s22 = sphi 0, %s19
    %s23 = sphi 0, %s20
    %s24 = sphi 0, %s21
    %s25 = sphi 0, %s22
    %s43 = sphi 0, %s45
    %s46 = sphi 0, %s43
    %s47 = sphi 0, %s46
    %s63 = sphi 0, %s47
    %s73 = sphi 0, %s75
    %s76 = sphi 0, %s73
    %s77 = sphi 0, %s76
    %s93 = sphi 0, %s77
    %s101 = sphi 0, %s103
    %s104 = sphi 0, %s101
    %s105 = sphi 0, %s104
    %s121 = sphi 0, %s105
    %s131 = sphi 0, %s133
    %s134 = sphi 0, %s131
    %s135 = sphi 0, %s134
    %s151 = sphi 0, %s135
  $region4: #{dc_and_topk_loss.1} parent=0 // loop_header_branch
    %13 = sbr.rel (%p11) target = $region8
  $region5: #{dc_and_topk_loss.1} parent=0 // loop_body
    %s15 = ssub.s32 %s10, 1
    %s16 = ssub.s32 %s10, 2
    %s26 = sadd.s32 1, %s19
    %p27 = scmp.ge.s32.totalorder %s26, 1
    %s28 = scalar_select %p27, 0, %s26
    %s29 = sadd.s32 1, %s18
    %s30 = scalar_select %p27, %s29, %s18
    %p31 = scmp.ge.s32.totalorder %s30, 2
    %s32 = scalar_select %p31, 0, %s30
    %s33 = sadd.s32 1, %s17
    %s34 = scalar_select %p31, %s33, %s17
    %p35 = scmp.ge.s32.totalorder %s34, 2
    %s36 = scalar_select %p35, 0, %s34
    %s37 = sadd.s32 %s18, %s19
    %s38 = sadd.s32 %s32, %s28
    %s39 = ssub.s32 %s17, %s36
    %s40 = ssub.s32 %s37, %s38
    %s41 = sor.u32 %s39, %s40
    %p42 = scmp.eq.s32.totalorder %s41, 0
    %s44 = sadd.s32 %s43, 1
    %s45 = scalar_select %p42, %s43, %s44
    %p48 = pneg %p42
    %p49 = scmp.eq.s32.totalorder %s10, 3
    %p50 = por %p48, %p49
    %p51 = scmp.ne.s32.totalorder %s43, %s46
    %p52 = scmp.eq.s32.totalorder %s10, 0
    %p53 = por %p51, %p52
    %p54 = scmp.ne.s32.totalorder %s43, %s46
    %p55 = scmp.eq.s32.totalorder %s15, 3
    %p56 = por %p54, %p55
    %p57 = scmp.ne.s32.totalorder %s46, %s47
    %p58 = scmp.eq.s32.totalorder %s15, 0
    %p59 = por %p57, %p58
    %p60 = scmp.ne.s32.totalorder %s46, %s47
    %p61 = scmp.eq.s32.totalorder %s16, 3
    %p62 = por %p60, %p61
    %p64 = scmp.ne.s32.totalorder %s47, %s63
    %p65 = scmp.eq.s32.totalorder %s16, 0
    %p66 = por %p64, %p65
    %s67 = sadd.s32 %s18, %s19
    %s68 = sadd.s32 %s32, %s28
    %s69 = ssub.s32 %s17, %s36
    %s70 = ssub.s32 %s67, %s68
    %s71 = sor.u32 %s69, %s70
    %p72 = scmp.eq.s32.totalorder %s71, 0
    %s74 = sadd.s32 %s73, 1
    %s75 = scalar_select %p72, %s73, %s74
    %p78 = pneg %p72
    %p79 = scmp.eq.s32.totalorder %s10, 3
    %p80 = por %p78, %p79
    %p81 = scmp.ne.s32.totalorder %s73, %s76
    %p82 = scmp.eq.s32.totalorder %s10, 0
    %p83 = por %p81, %p82
    %p84 = scmp.ne.s32.totalorder %s73, %s76
    %p85 = scmp.eq.s32.totalorder %s15, 3
    %p86 = por %p84, %p85
    %p87 = scmp.ne.s32.totalorder %s76, %s77
    %p88 = scmp.eq.s32.totalorder %s15, 0
    %p89 = por %p87, %p88
    %p90 = scmp.ne.s32.totalorder %s76, %s77
    %p91 = scmp.eq.s32.totalorder %s16, 3
    %p92 = por %p90, %p91
    %p94 = scmp.ne.s32.totalorder %s77, %s93
    %p95 = scmp.eq.s32.totalorder %s16, 0
    %p96 = por %p94, %p95
    %s97 = ssub.s32 %s17, %s36
    %s98 = ssub.s32 %s18, %s32
    %s99 = sor.u32 %s97, %s98
    %p100 = scmp.eq.s32.totalorder %s99, 0
    %s102 = sadd.s32 %s101, 1
    %s103 = scalar_select %p100, %s101, %s102
    %p106 = pneg %p100
    %p107 = scmp.eq.s32.totalorder %s10, 3
    %p108 = por %p106, %p107
    %p109 = scmp.ne.s32.totalorder %s101, %s104
    %p110 = scmp.eq.s32.totalorder %s10, 0
    %p111 = por %p109, %p110
    %p112 = scmp.ne.s32.totalorder %s101, %s104
    %p113 = scmp.eq.s32.totalorder %s15, 3
    %p114 = por %p112, %p113
    %p115 = scmp.ne.s32.totalorder %s104, %s105
    %p116 = scmp.eq.s32.totalorder %s15, 0
    %p117 = por %p115, %p116
    %p118 = scmp.ne.s32.totalorder %s104, %s105
    %p119 = scmp.eq.s32.totalorder %s16, 3
    %p120 = por %p118, %p119
    %p122 = scmp.ne.s32.totalorder %s105, %s121
    %p123 = scmp.eq.s32.totalorder %s16, 0
    %p124 = por %p122, %p123
    %s125 = sadd.s32 %s18, %s19
    %s126 = sadd.s32 %s32, %s28
    %s127 = ssub.s32 %s17, %s36
    %s128 = ssub.s32 %s125, %s126
    %s129 = sor.u32 %s127, %s128
    %p130 = scmp.eq.s32.totalorder %s129, 0
    %s132 = sadd.s32 %s131, 1
    %s133 = scalar_select %p130, %s131, %s132
    %p136 = pneg %p130
    %p137 = scmp.eq.s32.totalorder %s10, 3
    %p138 = por %p136, %p137
    %p139 = scmp.ne.s32.totalorder %s131, %s134
    %p140 = scmp.eq.s32.totalorder %s10, 0
    %p141 = por %p139, %p140
    %p142 = scmp.ne.s32.totalorder %s131, %s134
    %p143 = scmp.eq.s32.totalorder %s15, 3
    %p144 = por %p142, %p143
    %p145 = scmp.ne.s32.totalorder %s134, %s135
    %p146 = scmp.eq.s32.totalorder %s15, 0
    %p147 = por %p145, %p146
    %p148 = scmp.ne.s32.totalorder %s134, %s135
    %p149 = scmp.eq.s32.totalorder %s16, 3
    %p150 = por %p148, %p149
    %p152 = scmp.ne.s32.totalorder %s135, %s151
    %p153 = scmp.eq.s32.totalorder %s16, 0
    %p154 = por %p152, %p153
    %p155 = scmp.le.s32.totalorder 1, %s10
    %p156 = scmp.lt.s32.totalorder %s10, 5
    %p157 = pnand %p155, %p156
    %p158 = pneg %p157
    // Predicated region
    $region9: #{dc_and_topk_loss.1} parent=5 // pred_check
      _
    $region10: #{dc_and_topk_loss.1} parent=5 // pred_check_branch
      %160 = sbr.rel (%p157) target = $region12
    $region11: #{dc_and_topk_loss.1} parent=5 // pred_region
      %s161 = ssub.s32 %s10, 1
    $region12: #{dc_and_topk_loss.1} parent=5 // pred_fallthru
      _
    %p162 = scmp.lt.s32.totalorder %s10, 4
    // Predicated region
    $region13: #{dc_and_topk_loss.1} parent=5 // pred_check
      %p163 = pneg %p162
    $region14: #{dc_and_topk_loss.1} parent=5 // pred_check_branch
      %165 = sbr.rel (%p163) target = $region16
    $region15: #{dc_and_topk_loss.1} parent=5 // pred_region
      // Predicated region
      $region17: #{dc_and_topk_loss.1} parent=15 // pred_check
        %p166 = pneg %p53
      $region18: #{dc_and_topk_loss.1} parent=15 // pred_check_branch
        %168 = sbr.rel (%p166) target = $region20
      $region19: #{dc_and_topk_loss.1} parent=15 // pred_region
        %s169 = sadd.s32 %s18, %s19
        %p170 = scmp.lt.s32.totalorder %s17, 1
        %s171 = scalar_select %p170, %s17, 1
        %p172 = scmp.lt.s32.totalorder %s169, 1
        %s173 = scalar_select %p172, %s169, 1
        %s174 = smul.addr %s171, 2
        %s175 = sadd.s32 %s173, %s174
        %s176 = smul.addr %s175, 4
        %s177 = scalar_lea.vmem %s0, %s176
        %s178 = sadd.s32 %s18, %s19
      $region20: #{dc_and_topk_loss.1} parent=15 // pred_fallthru
        _
      // Predicated region
      $region21: #{dc_and_topk_loss.1} parent=15 // pred_check
        %p179 = pneg %p83
      $region22: #{dc_and_topk_loss.1} parent=15 // pred_check_branch
        %181 = sbr.rel (%p179) target = $region24
      $region23: #{dc_and_topk_loss.1} parent=15 // pred_region
        %s182 = sadd.s32 %s18, %s19
        %p183 = scmp.lt.s32.totalorder %s17, 1
        %s184 = scalar_select %p183, %s17, 1
        %p185 = scmp.lt.s32.totalorder %s182, 1
        %s186 = scalar_select %p185, %s182, 1
        %s187 = smul.addr %s184, 2
        %s188 = sadd.s32 %s186, %s187
        %s189 = scalar_lea.vmem %s1, %s188
        %s190 = sadd.s32 %s18, %s19
      $region24: #{dc_and_topk_loss.1} parent=15 // pred_fallthru
        _
    $region16: #{dc_and_topk_loss.1} parent=5 // pred_fallthru
      _
    %p191 = scmp.le.s32.totalorder 1, %s10
    %p192 = scmp.lt.s32.totalorder %s10, 5
    %p193 = pnand %p191, %p192
    %p194 = pneg %p193
    // Predicated region
    $region25: #{dc_and_topk_loss.1} parent=5 // pred_check
      _
    $region26: #{dc_and_topk_loss.1} parent=5 // pred_check_branch
      %196 = sbr.rel (%p193) target = $region28
    $region27: #{dc_and_topk_loss.1} parent=5 // pred_region
      %s197 = ssub.s32 %s10, 1
      %s198 = sadd.s32 %s21, %s22
      %p199 = scmp.lt.s32.totalorder %s20, 1
      %s200 = scalar_select %p199, %s20, 1
      %p201 = scmp.lt.s32.totalorder %s198, 1
      %s202 = scalar_select %p201, %s198, 1
      %s203 = smul.addr %s200, 2
      %s204 = sadd.s32 %s202, %s203
      %s205 = smul.addr %s204, 4
      %s206 = scalar_lea.vmem %s0, %s205
      %p207 = pneg %p59
      %p208 = pneg %p56
      %s209 = sadd.s32 %s21, %s22
      %p210 = scmp.lt.s32.totalorder %s20, 1
      %s211 = scalar_select %p210, %s20, 1
      %p212 = scmp.lt.s32.totalorder %s209, 1
      %s213 = scalar_select %p212, %s209, 1
      %s214 = smul.addr %s211, 2
      %s215 = sadd.s32 %s213, %s214
      %s216 = scalar_lea.vmem %s1, %s215
      %p217 = pneg %p89
      %p218 = pneg %p86
      %p219 = pneg %p117
      %p220 = pneg %p114
      %p221 = scmp.lt.s32.totalorder %s20, 1
      %s222 = scalar_select %p221, %s20, 1
      %p223 = scmp.lt.s32.totalorder %s21, 1
      %s224 = scalar_select %p223, %s21, 1
      %s225 = smul.addr %s222, 2
      %s226 = sadd.s32 %s224, %s225
      %s227 = smul.addr %s226, 4
      %s228 = scalar_lea.vmem %s2, %s227
      %p229 = pneg %p147
      %p230 = pneg %p144
      %s231 = sadd.s32 %s21, %s22
      %p232 = scmp.lt.s32.totalorder %s20, 1
      %s233 = scalar_select %p232, %s20, 1
      %p234 = scmp.lt.s32.totalorder %s231, 1
      %s235 = scalar_select %p234, %s231, 1
      %s236 = smul.addr %s233, 2
      %s237 = sadd.s32 %s235, %s236
      %s238 = scalar_lea.vmem %s3, %s237
      %s239 = sadd.s32 %s21, %s22
      %p240 = scmp.lt.s32.totalorder %s20, 1
      %s241 = scalar_select %p240, %s20, 1
      %p242 = scmp.lt.s32.totalorder %s239, 1
      %s243 = scalar_select %p242, %s239, 1
      %s244 = smul.addr %s241, 2
      %s245 = sadd.s32 %s243, %s244
      %s246 = smul.addr %s245, 4
      %s247 = scalar_lea.vmem %s0, %s246
      %s248 = sadd.s32 %s21, %s22
      %s249 = sadd.s32 %s21, %s22
      %p250 = scmp.lt.s32.totalorder %s20, 1
      %s251 = scalar_select %p250, %s20, 1
      %p252 = scmp.lt.s32.totalorder %s249, 1
      %s253 = scalar_select %p252, %s249, 1
      %s254 = smul.addr %s251, 2
      %s255 = sadd.s32 %s253, %s254
      %s256 = scalar_lea.vmem %s1, %s255
      %s257 = sadd.s32 %s21, %s22
      %p258 = scmp.lt.s32.totalorder %s20, 1
      %s259 = scalar_select %p258, %s20, 1
      %p260 = scmp.lt.s32.totalorder %s21, 1
      %s261 = scalar_select %p260, %s21, 1
      %s262 = smul.addr %s259, 2
      %s263 = sadd.s32 %s261, %s262
      %s264 = smul.addr %s263, 4
      %s265 = scalar_lea.vmem %s2, %s264
      %s266 = sadd.s32 %s21, %s22
      %p267 = scmp.lt.s32.totalorder %s20, 1
      %s268 = scalar_select %p267, %s20, 1
      %p269 = scmp.lt.s32.totalorder %s266, 1
      %s270 = scalar_select %p269, %s266, 1
      %s271 = smul.addr %s268, 2
      %s272 = sadd.s32 %s270, %s271
      %s273 = scalar_lea.vmem %s3, %s272
      %s274 = sadd.s32 %s21, %s22
      %p275 = scmp.eq.s32.totalorder %s22, 0
      // Predicated region
      $region29: #{dc_and_topk_loss.1} parent=27 // pred_check
        %p276 = pneg %p275
      $region30: #{dc_and_topk_loss.1} parent=27 // pred_check_branch
        %278 = sbr.rel (%p276) target = $region32
      $region31: #{dc_and_topk_loss.1} parent=27 // pred_region
        %vm279 = vcmask 3072
        %280 = vst.msk [vmem:[#allocation2] sm:$0xf] %vm279, 0.0
        %281 = vst.msk [vmem:[#allocation3] sm:$0xf] %vm279, 0.0
        %282 = vst.msk [vmem:[#allocation4] sm:$0xf] %vm279, 0.0
      $region32: #{dc_and_topk_loss.1} parent=27 // pred_fallthru
        _
      %v283 = vld [vmem:[%s247] sm:$0xf]
      %v284 = vld [vmem:[%s256] sm:$0x1]
      %vm285 = vcmask 1043456
      %v286 = vsel %vm285, %v283, -inf
      %v287 = vrot.slane %v286, 4
      %v288 = vmax.f32 %v286, %v287
      %v289 = vrot.slane %v288, 2
      %v290 = vmax.f32 %v288, %v289
      %v291 = vrot.slane %v290, 1
      %v292 = vmax.f32 %v290, %v291
      %v293 = vsub.f32 %v283, %v292
      %v294 = vmul.f32 %v293, 1.442695
      %v295 = vpow.pop %v294
      %v296 = vsel %vm285, %v295, 0.0
      %v297 = vrot.slane %v296, 4
      %v298 = vadd.f32 %v296, %v297
      %v299 = vrot.slane %v298, 2
      %v300 = vadd.f32 %v298, %v299
      %v301 = vrot.slane %v300, 1
      %v302 = vadd.f32 %v300, %v301
      %v303 = vrcp.pop %v302
      %v304 = vmul.f32 %v295, %v303
      %v305 = vlog2.pop %v302
      %v306 = vmul.f32 %v305, 0.6931472
      %v307 = vadd.f32 %v292, %v306
      %v308 = vlaneseq
      %v309 = vshrl.u32 %v308, 7
      %v310 = vlaneseq
      %v311 = vshrl.u32 %v310, 7
      %v312 = vsub.s32 0, %v311
      %v313 = vrot.slane %v284, %v312
      %vm314 = vcmp.eq.s32.totalorder %v313, %v309
      %v315 = vld [vmem:[#allocation2] sm:$0xf]
      %v316 = vsel %vm314, %v304, 0.0
      %v317 = vsel %vm285, %v316, 0.0
      %318 = vadd.xlane.f32.xlu0 %v317
      %v319 = vpop.xlane.xlu0 %318
      %v320 = vadd.f32 %v315, %v319
      %vm321 = vcmask 3072
      %322 = vst.msk [vmem:[#allocation2] sm:$0xf] %vm321, %v320
      %v323 = vld [vmem:[#allocation3] sm:$0xf]
      %v324 = vsel %vm285, %v304, 0.0
      %325 = vadd.xlane.f32.xlu0 %v324
      %v326 = vpop.xlane.xlu0 %325
      %v327 = vadd.f32 %v323, %v326
      %328 = vst.msk [vmem:[#allocation3] sm:$0xf] %vm321, %v327
      %v329 = vld [vmem:[#allocation4] sm:$0xf]
      %v330 = vsel %vm314, 1.0, 0.0
      %v331 = vsel %vm285, %v330, 0.0
      %332 = vadd.xlane.f32.xlu0 %v331
      %v333 = vpop.xlane.xlu0 %332
      %v334 = vadd.f32 %v329, %v333
      %335 = vst.msk [vmem:[#allocation4] sm:$0xf] %vm321, %v334
      %v336 = vsel %vm314, %v283, 0.0
      %v337 = vsel %vm285, %v336, 0.0
      %v338 = vrot.slane %v337, 4
      %v339 = vadd.f32 %v337, %v338
      %v340 = vrot.slane %v339, 2
      %v341 = vadd.f32 %v339, %v340
      %v342 = vrot.slane %v341, 1
      %v343 = vadd.f32 %v341, %v342
      %v344 = vsub.f32 %v307, %v343
      %345 = vst [vmem:[%s273] sm:$0x1] %v344
      // Predicated region
      $region33: #{dc_and_topk_loss.1} parent=27 // pred_check
        %p346 = pneg %p275
      $region34: #{dc_and_topk_loss.1} parent=27 // pred_check_branch
        %348 = sbr.rel (%p346) target = $region36
      $region35: #{dc_and_topk_loss.1} parent=27 // pred_region
        %v349 = vlaneseq
        %v350 = vand.u32 %v349, 127
        %vm351 = vcmp.eq.s32.totalorder %v350, 0
        %v352 = vld [vmem:[#allocation2] sm:$0xf]
        %354 = vset.pattern.permute.xlu0 0
        %355 = vperm.xlu0 %354, %v352
        %v356 = vpop.permute.xlu0 %355
        %v358 = vsel %vm351, %v356, 0.0
        %vm359 = vcmp.eq.s32.totalorder %v350, 1
        %v360 = vld [vmem:[#allocation3] sm:$0xf]
        %362 = vset.pattern.permute.xlu0 0
        %363 = vperm.xlu0 %362, %v360
        %v364 = vpop.permute.xlu0 %363
        %v366 = vsel %vm359, %v364, 0.0
        %v367 = vadd.f32 %v358, %v366
        %vm368 = vcmp.eq.s32.totalorder %v350, 2
        %v369 = vld [vmem:[#allocation4] sm:$0xf]
        %371 = vset.pattern.permute.xlu0 0
        %372 = vperm.xlu0 %371, %v369
        %v373 = vpop.permute.xlu0 %372
        %v375 = vsel %vm368, %v373, 0.0
        %v376 = vadd.f32 %v367, %v375
        %377 = vst [vmem:[%s265] sm:$0xf] %v376
      $region36: #{dc_and_topk_loss.1} parent=27 // pred_fallthru
        _
      %p378 = scmp.lt.s32.totalorder %s20, 1
      %s379 = scalar_select %p378, %s20, 1
      %p380 = scmp.lt.s32.totalorder %s21, 1
      %s381 = scalar_select %p380, %s21, 1
      %s382 = smul.addr %s379, 2
      %s383 = sadd.s32 %s381, %s382
      %s384 = smul.addr %s383, 4
      %s385 = scalar_lea.vmem %s2, %s384
      %s386 = sadd.s32 %s21, %s22
      %p387 = scmp.lt.s32.totalorder %s20, 1
      %s388 = scalar_select %p387, %s20, 1
      %p389 = scmp.lt.s32.totalorder %s386, 1
      %s390 = scalar_select %p389, %s386, 1
      %s391 = smul.addr %s388, 2
      %s392 = sadd.s32 %s390, %s391
      %s393 = scalar_lea.vmem %s3, %s392
      // Predicated region
      $region37: #{dc_and_topk_loss.1} parent=27 // pred_check
        %p394 = pneg %p114
      $region38: #{dc_and_topk_loss.1} parent=27 // pred_check_branch
        %396 = sbr.rel (%p394) target = $region40
      $region39: #{dc_and_topk_loss.1} parent=27 // pred_region
        _
      $region40: #{dc_and_topk_loss.1} parent=27 // pred_fallthru
        _
      // Predicated region
      $region41: #{dc_and_topk_loss.1} parent=27 // pred_check
        %p397 = pneg %p144
      $region42: #{dc_and_topk_loss.1} parent=27 // pred_check_branch
        %399 = sbr.rel (%p397) target = $region44
      $region43: #{dc_and_topk_loss.1} parent=27 // pred_region
        %s400 = sadd.s32 %s21, %s22
      $region44: #{dc_and_topk_loss.1} parent=27 // pred_fallthru
        _
    $region28: #{dc_and_topk_loss.1} parent=5 // pred_fallthru
      _
    %p401 = scmp.le.s32.totalorder 2, %s10
    // Predicated region
    $region45: #{dc_and_topk_loss.1} parent=5 // pred_check
      %p402 = pneg %p401
    $region46: #{dc_and_topk_loss.1} parent=5 // pred_check_branch
      %404 = sbr.rel (%p402) target = $region48
    $region47: #{dc_and_topk_loss.1} parent=5 // pred_region
      %s405 = ssub.s32 %s10, 2
      // Predicated region
      $region49: #{dc_and_topk_loss.1} parent=47 // pred_check
        %p406 = pneg %p120
      $region50: #{dc_and_topk_loss.1} parent=47 // pred_check_branch
        %408 = sbr.rel (%p406) target = $region52
      $region51: #{dc_and_topk_loss.1} parent=47 // pred_region
        %p409 = scmp.lt.s32.totalorder %s23, 1
        %s410 = scalar_select %p409, %s23, 1
        %p411 = scmp.lt.s32.totalorder %s24, 1
        %s412 = scalar_select %p411, %s24, 1
        %s413 = smul.addr %s410, 2
        %s414 = sadd.s32 %s412, %s413
        %s415 = smul.addr %s414, 4
        %s416 = scalar_lea.vmem %s2, %s415
      $region52: #{dc_and_topk_loss.1} parent=47 // pred_fallthru
        _
      // Predicated region
      $region53: #{dc_and_topk_loss.1} parent=47 // pred_check
        %p417 = pneg %p150
      $region54: #{dc_and_topk_loss.1} parent=47 // pred_check_branch
        %419 = sbr.rel (%p417) target = $region56
      $region55: #{dc_and_topk_loss.1} parent=47 // pred_region
        %s420 = sadd.s32 %s24, %s25
        %p421 = scmp.lt.s32.totalorder %s23, 1
        %s422 = scalar_select %p421, %s23, 1
        %p423 = scmp.lt.s32.totalorder %s420, 1
        %s424 = scalar_select %p423, %s420, 1
        %s425 = smul.addr %s422, 2
        %s426 = sadd.s32 %s424, %s425
        %s427 = scalar_lea.vmem %s3, %s426
      $region56: #{dc_and_topk_loss.1} parent=47 // pred_fallthru
        _
    $region48: #{dc_and_topk_loss.1} parent=5 // pred_fallthru
      _
  $region6: #{dc_and_topk_loss.1} parent=0 // loop_footer
    %s14 = sadd.s32 1, %s10
  $region7: #{dc_and_topk_loss.1} parent=0 // loop_footer_branch
    %9 = sbr.rel target = $region3
  $region8: #{dc_and_topk_loss.1} parent=0 // loop_exit
    _

</llo_original>
